<compile_context>
chip_gen: v7x
topology: tpu7x:2x2x1
jax: 0.10.0
libtpu: 0.0.40
codegen_flags: <defaults>
</compile_context>

<pallas_src>
import math

import jax
import jax.numpy as jnp
from jax.experimental import pallas as pl
from jax.experimental.pallas import tpu as pltpu


def _round_up(x, m):
    return (x + m - 1) // m * m


# ---------------------------------------------------------------------------
# Kernels
# ---------------------------------------------------------------------------
def _sae_kernel_direct(x_ref, we_ref, be_ref, wd_ref, bd_ref, dec_ref, enc_ref):
    """float32-output variant: decoder partial sums accumulate straight into
    the (hb-resident) decoded output block — no scratch, no final copy."""
    hb = pl.program_id(1)

    @pl.when(hb == 0)
    def _():
        dec_ref[...] = jnp.zeros_like(dec_ref)

    # Encoder tile: ReLU(x @ W_e[:, tile] + b_e[tile]); K = d_in (unpadded).
    enc = jnp.dot(x_ref[...], we_ref[...], preferred_element_type=jnp.float32)
    enc = jnp.maximum(enc + be_ref[...].astype(jnp.float32), 0.0)
    enc_ref[...] = enc.astype(enc_ref.dtype)

    # Decoder partial sum over this hidden tile (f32 accumulation in output).
    dec_ref[...] += jnp.dot(enc.astype(wd_ref.dtype), wd_ref[...],
                            preferred_element_type=jnp.float32)

    @pl.when(hb == pl.num_programs(1) - 1)
    def _():
        dec_ref[...] += bd_ref[...].astype(jnp.float32)


def _sae_kernel_scratch(x_ref, we_ref, be_ref, wd_ref, bd_ref, dec_ref, enc_ref,
                        acc_ref):
    """non-f32-output variant: accumulate in an f32 VMEM scratch, cast once."""
    hb = pl.program_id(1)

    @pl.when(hb == 0)
    def _():
        acc_ref[...] = jnp.zeros_like(acc_ref)

    enc = jnp.dot(x_ref[...], we_ref[...], preferred_element_type=jnp.float32)
    enc = jnp.maximum(enc + be_ref[...].astype(jnp.float32), 0.0)
    enc_ref[...] = enc.astype(enc_ref.dtype)

    acc_ref[...] += jnp.dot(enc.astype(wd_ref.dtype), wd_ref[...],
                            preferred_element_type=jnp.float32)

    @pl.when(hb == pl.num_programs(1) - 1)
    def _():
        dec_ref[...] = (acc_ref[...]
                        + bd_ref[...].astype(jnp.float32)).astype(dec_ref.dtype)


# ---------------------------------------------------------------------------
# Tiling selection (prefers exact tiling -> no pad, no output slice copy)
# ---------------------------------------------------------------------------
def _choose_hidden_tiling(H, th_max):
    """Return (n_tiles, tile_width, padded_H)."""
    if H <= th_max:
        return 1, H, H                              # single full-dim block
    if H % 128 == 0:
        t0 = max((th_max // 128) * 128, 128)
        for t in range(t0, 127, -128):              # largest 128-mult divisor
            if H % t == 0:
                return H // t, t, H
    nh = -(-H // th_max)                            # fallback: pad H
    th = _round_up(-(-H // nh), 128)
    return nh, th, th * nh


def _choose_batch_tiling(B, tb_max):
    """Return (tile_rows, padded_B)."""
    tb_max = max(8, tb_max - tb_max % 8)
    b8 = _round_up(B, 8)
    if b8 <= tb_max:
        return b8, b8
    if B % 8 == 0:
        for t in range(tb_max, 127, -8):            # largest /8 divisor of B
            if B % t == 0:
                return t, B
    return tb_max, _round_up(B, tb_max)


# ---------------------------------------------------------------------------
# Wrapper
# ---------------------------------------------------------------------------
def sparse_autoencoder_forward(x, w_enc, b_enc, w_dec, b_dec, *,
                               tb=1024, th=2048, vmem_limit_bytes=None):
    """x: (B, D_in); w_enc: (D_in, H); b_enc: (H,); w_dec: (H, D_in); b_dec: (D_in,)."""
    B, d_in = x.shape
    H = w_enc.shape[1]
    out_dtype = x.dtype

    # Lane-dense padding only for output-facing feature dims (W_d cols, b_d,
    # decoded).  The contraction dim (x / W_e rows) stays at d_in.
    dp = _round_up(d_in, 128)

    nh, th_eff, hp = _choose_hidden_tiling(H, th)
    tb_eff, bp = _choose_batch_tiling(B, tb)

    # -- zero-pad only what needs it (exact zeros keep valid entries exact) --
    xp = x if bp == B else jnp.pad(x, ((0, bp - B), (0, 0)))
    wep = w_enc if hp == H else jnp.pad(w_enc, ((0, 0), (0, hp - H)))
    bep = b_enc.reshape(1, H)
    if hp != H:
        bep = jnp.pad(bep, ((0, 0), (0, hp - H)))
    wdp = jnp.pad(w_dec, ((0, hp - H), (0, dp - d_in)))
    bdp = jnp.pad(b_dec.reshape(1, d_in), ((0, 0), (0, dp - d_in)))

    direct = out_dtype == jnp.float32
    kernel = _sae_kernel_direct if direct else _sae_kernel_scratch
    scratch_shapes = [] if direct else [pltpu.VMEM((tb_eff, dp), jnp.float32)]

    if vmem_limit_bytes is None:
        itemsize = jnp.dtype(out_dtype).itemsize
        blk = 2 * (tb_eff * d_in + d_in * th_eff + 8 * th_eff
                   + th_eff * dp + 8 * dp + tb_eff * dp + tb_eff * th_eff)
        blk *= itemsize
        if not direct:
            blk += tb_eff * dp * 4
        # headroom for compiler internal scratch; stays inside v7x's 64 MiB
        # at the default tb=1024/th=2048 (and well inside 128 MiB on v5e/v6e).
        vmem_limit_bytes = min(max(int(blk * 1.5) + (8 << 20), 32 << 20),
                               100 << 20)

    grid = (bp // tb_eff, nh)
    dec_p, enc_p = pl.pallas_call(
        kernel,
        out_shape=(jax.ShapeDtypeStruct((bp, dp), out_dtype),   # decoded (padded)
                   jax.ShapeDtypeStruct((bp, hp), out_dtype)),  # encoded
        grid_spec=pltpu.PrefetchScalarGridSpec(
            num_scalar_prefetch=0,
            grid=grid,
            in_specs=[
                pl.BlockSpec((tb_eff, d_in), lambda i, hb: (i, 0)),     # x tile
                pl.BlockSpec((d_in, th_eff), lambda i, hb: (0, hb)),    # W_e slab
                pl.BlockSpec((1, th_eff), lambda i, hb: (0, hb)),       # b_e slab
                pl.BlockSpec((th_eff, dp), lambda i, hb: (hb, 0)),      # W_d slab
                pl.BlockSpec((1, dp), lambda i, hb: (0, 0)),            # b_d
            ],
            out_specs=[
                pl.BlockSpec((tb_eff, dp), lambda i, hb: (i, 0)),       # decoded
                pl.BlockSpec((tb_eff, th_eff), lambda i, hb: (i, hb)),  # encoded
            ],
            scratch_shapes=scratch_shapes,
        ),
        compiler_params=pltpu.CompilerParams(
            dimension_semantics=("parallel", "arbitrary"),
            vmem_limit_bytes=vmem_limit_bytes,
        ),
    )(xp, wep, bep, wdp, bdp)

    decoded = dec_p[:B, :d_in]                      # tiny (B x 128 -> B x d_in)
    # Avoid a full re-read/re-write of the dominant (B,H) tensor when no
    # padding was applied (the common case thanks to the tiling selection).
    encoded = enc_p if (bp == B and hp == H) else enc_p[:B, :H]
    return decoded, encoded


def _init_linear(key, fan_in, fan_out, dtype=jnp.float32):
    """nn.Linear default init: U(-1/sqrt(fan_in), 1/sqrt(fan_in)).
    Weight returned pre-transposed to (fan_in, fan_out); bias (fan_out,)."""
    kw, kb = jax.random.split(key)
    bound = 1.0 / math.sqrt(fan_in)
    w = jax.random.uniform(kw, (fan_in, fan_out), dtype, -bound, bound)
    b = jax.random.uniform(kb, (fan_out,), dtype, -bound, bound)
    return w, b


def _check(batch, input_size, hidden_size, key, *, tb=1024, th=2048):
    kx, ke, kd = jax.random.split(key, 3)
    x = jax.random.normal(kx, (batch, input_size), jnp.float32)
    w_enc, b_enc = _init_linear(ke, input_size, hidden_size)
    w_dec, b_dec = _init_linear(kd, hidden_size, input_size)

    decoded, encoded = sparse_autoencoder_forward(
        x, w_enc, b_enc, w_dec, b_dec, tb=tb, th=th)
    jax.block_until_ready((decoded, encoded))

    enc_ref = jnp.maximum(x @ w_enc + b_enc, 0.0)
    dec_ref = enc_ref @ w_dec + b_dec
    assert encoded.shape == (batch, hidden_size)
    assert decoded.shape == (batch, input_size)
    assert jnp.allclose(encoded, enc_ref, atol=1e-4, rtol=1e-4)
    assert jnp.allclose(decoded, dec_ref, atol=1e-4, rtol=1e-4)


if __name__ == "__main__":
    # Small shapes consistent with the module: the real model uses
    # input_size = reps.shape[1] (~20) and hidden_size = 10**4; scaled-down here.
    key = jax.random.PRNGKey(0)
    k1, k2 = jax.random.split(key)

    # 1) single hidden tile, no padding anywhere (exact-tiling fast path)
    _check(batch=16, input_size=20, hidden_size=32, key=k1)
    # 2) multiple hidden tiles -> exercises the hb-reduction accumulation path
    _check(batch=40, input_size=20, hidden_size=384, key=k2, th=128)

    print("KERNEL_OK")
</pallas_src>

<mosaic_0001>
module attributes {stable_mosaic.version = 11 : i64} {
  func.func @_sae_kernel_direct(%arg0: i32, %arg1: i32, %arg2: memref<16x20xf32, #tpu.memory_space<vmem>>, %arg3: memref<20x32xf32, #tpu.memory_space<vmem>>, %arg4: memref<1x32xf32, #tpu.memory_space<vmem>>, %arg5: memref<32x128xf32, #tpu.memory_space<vmem>>, %arg6: memref<1x128xf32, #tpu.memory_space<vmem>>, %arg7: memref<16x128xf32, #tpu.memory_space<vmem>>, %arg8: memref<16x32xf32, #tpu.memory_space<vmem>>) attributes {dimension_semantics = [#tpu.dimension_semantics<parallel>, #tpu.dimension_semantics<arbitrary>], iteration_bounds = array<i64: 1, 1>, scalar_prefetch = 0 : i64, scratch_operands = 0 : i64, tpu.core_type = #tpu.core_type<tc>, window_params = [{transform_indices = @transform_0, window_bounds = array<i64: 16, 20>}, {transform_indices = @transform_1, window_bounds = array<i64: 20, 32>}, {transform_indices = @transform_2, window_bounds = array<i64: 1, 32>}, {transform_indices = @transform_3, window_bounds = array<i64: 32, 128>}, {pipeline_mode = #tpu.pipeline_mode<synchronous>, transform_indices = @transform_4, window_bounds = array<i64: 1, 128>}, {transform_indices = @transform_5, window_bounds = array<i64: 16, 128>}, {transform_indices = @transform_6, window_bounds = array<i64: 16, 32>}]} {
    %c0_i32 = arith.constant 0 : i32
    %0 = arith.cmpi eq, %arg1, %c0_i32 : i32
    %1 = arith.extui %0 : i1 to i32
    %c0_i32_0 = arith.constant 0 : i32
    %2 = arith.cmpi ne, %1, %c0_i32_0 : i32
    scf.if %2 {
      %cst_18 = arith.constant 0.000000e+00 : f32
      %20 = vector.broadcast %cst_18 : f32 to vector<16x128xf32>
      %c0_19 = arith.constant 0 : index
      %c0_20 = arith.constant 0 : index
      %21 = vector.load %arg7[%c0_19, %c0_20] : memref<16x128xf32, #tpu.memory_space<vmem>>, vector<16x128xf32>
      tpu.vector_store %arg7[%c0_19, %c0_20], %20 {strides = array<i32>} : memref<16x128xf32, #tpu.memory_space<vmem>>, vector<16x128xf32>,
    } else {
    }
    %c0 = arith.constant 0 : index
    %c0_1 = arith.constant 0 : index
    %3 = vector.load %arg2[%c0, %c0_1] : memref<16x20xf32, #tpu.memory_space<vmem>>, vector<16x20xf32>
    %c0_2 = arith.constant 0 : index
    %c0_3 = arith.constant 0 : index
    %4 = vector.load %arg3[%c0_2, %c0_3] : memref<20x32xf32, #tpu.memory_space<vmem>>, vector<20x32xf32>
    %cst = arith.constant dense<0.000000e+00> : vector<16x32xf32>
    %5 = tpu.matmul %3, %4, %cst {dimension_numbers = #tpu.dot_dimension_numbers<[1], [0], [0], [1], [0, 0, 1, 1], [], []>} : vector<16x20xf32>, vector<20x32xf32>, vector<16x32xf32> -> vector<16x32xf32>
    %c0_4 = arith.constant 0 : index
    %c0_5 = arith.constant 0 : index
    %6 = vector.load %arg4[%c0_4, %c0_5] : memref<1x32xf32, #tpu.memory_space<vmem>>, vector<1x32xf32>
    %7 = vector.broadcast %6 : vector<1x32xf32> to vector<16x32xf32>
    %8 = arith.addf %5, %7 : vector<16x32xf32>
    %cst_6 = arith.constant 0.000000e+00 : f32
    %9 = vector.broadcast %cst_6 : f32 to vector<16x32xf32>
    %10 = arith.maximumf %8, %9 : vector<16x32xf32>
    %c0_7 = arith.constant 0 : index
    %c0_8 = arith.constant 0 : index
    %11 = vector.load %arg8[%c0_7, %c0_8] : memref<16x32xf32, #tpu.memory_space<vmem>>, vector<16x32xf32>
    tpu.vector_store %arg8[%c0_7, %c0_8], %10 {strides = array<i32>} : memref<16x32xf32, #tpu.memory_space<vmem>>, vector<16x32xf32>,
    %c0_9 = arith.constant 0 : index
    %c0_10 = arith.constant 0 : index
    %12 = vector.load %arg7[%c0_9, %c0_10] : memref<16x128xf32, #tpu.memory_space<vmem>>, vector<16x128xf32>
    %c0_11 = arith.constant 0 : index
    %c0_12 = arith.constant 0 : index
    %13 = vector.load %arg5[%c0_11, %c0_12] : memref<32x128xf32, #tpu.memory_space<vmem>>, vector<32x128xf32>
    %cst_13 = arith.constant dense<0.000000e+00> : vector<16x128xf32>
    %14 = tpu.matmul %10, %13, %cst_13 {dimension_numbers = #tpu.dot_dimension_numbers<[1], [0], [0], [1], [0, 0, 1, 1], [], []>} : vector<16x32xf32>, vector<32x128xf32>, vector<16x128xf32> -> vector<16x128xf32>
    %15 = arith.addf %12, %14 : vector<16x128xf32>
    %c0_14 = arith.constant 0 : index
    %c0_15 = arith.constant 0 : index
    %16 = vector.load %arg7[%c0_14, %c0_15] : memref<16x128xf32, #tpu.memory_space<vmem>>, vector<16x128xf32>
    tpu.vector_store %arg7[%c0_14, %c0_15], %15 {strides = array<i32>} : memref<16x128xf32, #tpu.memory_space<vmem>>, vector<16x128xf32>,
    %c0_i32_16 = arith.constant 0 : i32
    %17 = arith.cmpi eq, %arg1, %c0_i32_16 : i32
    %18 = arith.extui %17 : i1 to i32
    %c0_i32_17 = arith.constant 0 : i32
    %19 = arith.cmpi ne, %18, %c0_i32_17 : i32
    scf.if %19 {
      %c0_18 = arith.constant 0 : index
      %c0_19 = arith.constant 0 : index
      %20 = vector.load %arg7[%c0_18, %c0_19] : memref<16x128xf32, #tpu.memory_space<vmem>>, vector<16x128xf32>
      %c0_20 = arith.constant 0 : index
      %c0_21 = arith.constant 0 : index
      %21 = vector.load %arg6[%c0_20, %c0_21] : memref<1x128xf32, #tpu.memory_space<vmem>>, vector<1x128xf32>
      %22 = vector.broadcast %21 : vector<1x128xf32> to vector<16x128xf32>
      %23 = arith.addf %20, %22 : vector<16x128xf32>
      %c0_22 = arith.constant 0 : index
      %c0_23 = arith.constant 0 : index
      %24 = vector.load %arg7[%c0_22, %c0_23] : memref<16x128xf32, #tpu.memory_space<vmem>>, vector<16x128xf32>
      tpu.vector_store %arg7[%c0_22, %c0_23], %23 {strides = array<i32>} : memref<16x128xf32, #tpu.memory_space<vmem>>, vector<16x128xf32>,
    } else {
    }
    return
  }
  func.func @transform_0(%arg0: i32, %arg1: i32) -> (i32, i32) {
    %c0_i32 = arith.constant 0 : i32
    %c0_i32_0 = arith.constant 0 : i32
    return %arg0, %c0_i32 : i32, i32
  }
  func.func @transform_1(%arg0: i32, %arg1: i32) -> (i32, i32) {
    %c0_i32 = arith.constant 0 : i32
    %c0_i32_0 = arith.constant 0 : i32
    return %c0_i32, %arg1 : i32, i32
  }
  func.func @transform_2(%arg0: i32, %arg1: i32) -> (i32, i32) {
    %c0_i32 = arith.constant 0 : i32
    %c0_i32_0 = arith.constant 0 : i32
    return %c0_i32, %arg1 : i32, i32
  }
  func.func @transform_3(%arg0: i32, %arg1: i32) -> (i32, i32) {
    %c0_i32 = arith.constant 0 : i32
    %c0_i32_0 = arith.constant 0 : i32
    return %arg1, %c0_i32 : i32, i32
  }
  func.func @transform_4(%arg0: i32, %arg1: i32) -> (i32, i32) {
    %c0_i32 = arith.constant 0 : i32
    %c0_i32_0 = arith.constant 0 : i32
    %c0_i32_1 = arith.constant 0 : i32
    return %c0_i32, %c0_i32_0 : i32, i32
  }
  func.func @transform_5(%arg0: i32, %arg1: i32) -> (i32, i32) {
    %c0_i32 = arith.constant 0 : i32
    %c0_i32_0 = arith.constant 0 : i32
    return %arg0, %c0_i32 : i32, i32
  }
  func.func @transform_6(%arg0: i32, %arg1: i32) -> (i32, i32) {
    %c0_i32 = arith.constant 0 : i32
    return %arg0, %arg1 : i32, i32
  }
}

</mosaic_0001>

<llo_original>
// kernel: tpu_custom_call.1
$region0: #{tpu_custom_call.1}
  #allocation0 [shape = 'u32[]', space=smem, size = 0x4, offset = 0x4, fixed_abs, tag = 'smem constant byte address 0x4 - core index']
  #allocation1 [shape = 'u32[144,128]{1,0:T(1,128)}', space=vmem, size = 0x12000, scoped, tag = 'internal scratch']
  %s0 = inlined_call_operand.hbm [shape: f32[16,20], index: 0, kind: input, shape index: {}]
  %s1 = inlined_call_operand.hbm [shape: f32[20,32], index: 1, kind: input, shape index: {}]
  %s2 = inlined_call_operand.vmem [shape: f32[1,32], index: 2, kind: input, shape index: {}]
  %s3 = inlined_call_operand.hbm [shape: f32[32,128], index: 3, kind: input, shape index: {}]
  %s4 = inlined_call_operand.vmem [shape: f32[1,128], index: 4, kind: input, shape index: {}]
  %s5 = inlined_call_operand.hbm [shape: f32[16,128], index: 5, kind: output, shape index: {0}]
  %s6 = inlined_call_operand.hbm [shape: f32[16,32], index: 6, kind: output, shape index: {1}]
  %7 = xla_tuple %s5, %s6
  %s8 = sld [smem:[#allocation0]]
  $region58: #{tpu_custom_call.1} parent=0
    _
  %s10 = ssub.s32 1, %s8
  %s11 = scalar_select 0, %s10, %s8
  $region1: #{tpu_custom_call.1} parent=0
    #allocation2 [shape = 'u8[8192]{0}', space=vmem, size = 0x2000, scoped, tag = 'input window, operand 0, single buffered']
    #allocation3 [shape = 's32[1]{0}', space=sflag, size = 0x4, scoped, tag = 'scoped memory for tpu_custom_call.1']
    #allocation4 [shape = 's32[1]{0}', space=sflag, size = 0x4, scoped, tag = 'scoped memory for tpu_custom_call.1']
    #allocation5 [shape = 'u8[12288]{0}', space=vmem, size = 0x3000, scoped, tag = 'input window, operand 1, single buffered']
    #allocation6 [shape = 's32[1]{0}', space=sflag, size = 0x4, scoped, tag = 'scoped memory for tpu_custom_call.1']
    #allocation7 [shape = 'u8[16384]{0}', space=vmem, size = 0x4000, scoped, tag = 'input window, operand 3, single buffered']
    #allocation8 [shape = 'u8[8192]{0}', space=vmem, size = 0x2000, scoped, tag = 'output window, operand 0, single buffered']
    #allocation9 [shape = 'u8[8192]{0}', space=vmem, size = 0x2000, scoped, tag = 'output window, operand 1, single buffered']
    #allocation10 [shape = 's32[1]{0}', space=sflag, size = 0x4, scoped, tag = 'scoped memory for tpu_custom_call.1']
    %12 = vsyncpa [#allocation3], 0
    %13 = vsyncpa [#allocation6], 0
    %14 = vsyncpa [#allocation4], 0
    %15 = vsyncpa [#allocation10], 0
    // Predicated region
    $region2: #{tpu_custom_call.1} parent=1 // pred_check
      _
    $region3: #{tpu_custom_call.1} parent=1 // pred_check_branch
      %17 = sbr.rel (0) target = $region5
    $region4: #{tpu_custom_call.1} parent=1 // pred_region
      %s19 = ssub.s32 256, 256
      %20 = vsyncadd [#allocation3], %s19
      %s21 = sshll.u32 [#allocation2], 4
      %s22 = int_to_ptr.vmem [resolvable:$true] %s21
      %27 = dma.hbm_to_vmem [thread:$0]  %s0, 256, %s22, [#allocation3], 128, 128, 8
    $region5: #{tpu_custom_call.1} parent=1 // pred_fallthru
      _
    // Predicated region
    $region6: #{tpu_custom_call.1} parent=1 // pred_check
      _
    $region7: #{tpu_custom_call.1} parent=1 // pred_check_branch
      %29 = sbr.rel (0) target = $region9
    $region8: #{tpu_custom_call.1} parent=1 // pred_region
      %s31 = ssub.s32 384, 384
      %32 = vsyncadd [#allocation6], %s31
      %s33 = sshll.u32 [#allocation5], 4
      %s34 = int_to_ptr.vmem [resolvable:$true] %s33
      %39 = dma.hbm_to_vmem [thread:$0]  %s1, 384, %s34, [#allocation6], 128, 128, 8
    $region9: #{tpu_custom_call.1} parent=1 // pred_fallthru
      _
    // Predicated region
    $region10: #{tpu_custom_call.1} parent=1 // pred_check
      _
    $region11: #{tpu_custom_call.1} parent=1 // pred_check_branch
      %41 = sbr.rel (0) target = $region13
    $region12: #{tpu_custom_call.1} parent=1 // pred_region
      _
    $region13: #{tpu_custom_call.1} parent=1 // pred_fallthru
      _
    // Predicated region
    $region14: #{tpu_custom_call.1} parent=1 // pred_check
      _
    $region15: #{tpu_custom_call.1} parent=1 // pred_check_branch
      %43 = sbr.rel (0) target = $region17
    $region16: #{tpu_custom_call.1} parent=1 // pred_region
      %s45 = ssub.s32 512, 512
      %46 = vsyncadd [#allocation6], %s45
      %s47 = sshll.u32 [#allocation7], 4
      %s48 = int_to_ptr.vmem [resolvable:$true] %s47
      %53 = dma.hbm_to_vmem [thread:$0]  %s3, 512, %s48, [#allocation6], 128, 128, 8
    $region17: #{tpu_custom_call.1} parent=1 // pred_fallthru
      _
    // Predicated region
    $region18: #{tpu_custom_call.1} parent=1 // pred_check
      _
    $region19: #{tpu_custom_call.1} parent=1 // pred_check_branch
      %55 = sbr.rel (0) target = $region21
    $region20: #{tpu_custom_call.1} parent=1 // pred_region
      _
    $region21: #{tpu_custom_call.1} parent=1 // pred_fallthru
      _
    // Predicated region
    $region22: #{tpu_custom_call.1} parent=1 // pred_check
      _
    $region23: #{tpu_custom_call.1} parent=1 // pred_check_branch
      %57 = sbr.rel (0) target = $region25
    $region24: #{tpu_custom_call.1} parent=1 // pred_region
      %58 = dma.done [#allocation3], 256
    $region25: #{tpu_custom_call.1} parent=1 // pred_fallthru
      _
    // Predicated region
    $region26: #{tpu_custom_call.1} parent=1 // pred_check
      _
    $region27: #{tpu_custom_call.1} parent=1 // pred_check_branch
      %60 = sbr.rel (0) target = $region29
    $region28: #{tpu_custom_call.1} parent=1 // pred_region
      %61 = dma.done [#allocation6], 384
    $region29: #{tpu_custom_call.1} parent=1 // pred_fallthru
      _
    // Predicated region
    $region30: #{tpu_custom_call.1} parent=1 // pred_check
      _
    $region31: #{tpu_custom_call.1} parent=1 // pred_check_branch
      %63 = sbr.rel (0) target = $region33
    $region32: #{tpu_custom_call.1} parent=1 // pred_region
      %64 = dma.done [#allocation6], 512
    $region33: #{tpu_custom_call.1} parent=1 // pred_fallthru
      _
    %p65 = scmp.eq.s32.totalorder 0, 0
    // Predicated region
    $region34: #{tpu_custom_call.1} parent=1 // pred_check
      %p66 = pneg %p65
    $region35: #{tpu_custom_call.1} parent=1 // pred_check_branch
      %68 = sbr.rel (%p66) target = $region37
    $region36: #{tpu_custom_call.1} parent=1 // pred_region
      %69 = vst [vmem:[#allocation8] sm:$0xff] 0.0
      %70 = vst [vmem:[#allocation8 + $0x8] sm:$0xff] 0.0
    $region37: #{tpu_custom_call.1} parent=1 // pred_fallthru
      _
    %v71 = vld [vmem:[#allocation2] sm:$0xff]
    %v72 = vld [vmem:[#allocation2 + $0x8] sm:$0xff]
    %v73 = vld [vmem:[#allocation5] sm:$0xff]
    %v74 = vld [vmem:[#allocation5 + $0x8] sm:$0xff]
    %v75 = vld [vmem:[#allocation5 + $0x10] sm:$0xf]
    %v76 = vld [vmem:[%s2] sm:$0x1]
    %v78 = vlaneseq
    %v79 = vshrl.u32 %v78, 7
    %v80 = vsub.s32 0, %v79
    %v81 = vrot.slane %v76, %v80
    %vm83 = vcmask 162816
    %v85 = vsel %vm83, %v71, 0
    %v88 = vsel %vm83, %v72, 0
    %vm90 = vcmask 1043456
    %v92 = vsel %vm90, %v75, 0
    %94 = vmatprep.subr.mxu0 0.0
    %95 = vmatpush1.msra.mxu0 %v73
    %96 = vmatprep.subr.mxu0 0.0
    %97 = vmatpush1.msra.mxu0 %v74
    %98 = vmatprep.subr.mxu0 0.0
    %99 = vmatpush1.msra.mxu0 %v92
    %100 = vmatprep.subr.mxu0 0.0
    %101 = vmatpush1.msra.mxu0 0.0
    %102 = vmatprep.subr.mxu0 0.0
    %103 = vmatpush1.msra.mxu0 0.0
    %104 = vmatprep.subr.mxu0 0.0
    %105 = vmatpush1.msra.mxu0 0.0
    %106 = vmatprep.subr.mxu0 0.0
    %107 = vmatpush1.msra.mxu0 0.0
    %108 = vmatprep.subr.mxu0 0.0
    %109 = vmatpush1.msra.mxu0 0.0
    %110 = vmatprep.subr.mxu0 0.0
    %111 = vmatpush1.msra.mxu0 0.0
    %112 = vmatprep.subr.mxu0 0.0
    %113 = vmatpush1.msra.mxu0 0.0
    %114 = vmatprep.subr.mxu0 0.0
    %115 = vmatpush1.msra.mxu0 0.0
    %116 = vmatprep.subr.mxu0 0.0
    %117 = vmatpush1.msra.mxu0 0.0
    %118 = vmatprep.subr.mxu0 0.0
    %119 = vmatpush1.msra.mxu0 0.0
    %120 = vmatprep.subr.mxu0 0.0
    %121 = vmatpush1.msra.mxu0 0.0
    %122 = vmatprep.subr.mxu0 0.0
    %123 = vmatpush1.msra.mxu0 0.0
    %124 = vmatprep.subr.mxu0 0.0
    %125 = vmatpush1.msra.mxu0 0.0
    %126 = vmatprep.subr.mxu0 0.0
    %127 = vmatpush1.msra.mxu0 0.0
    %128 = vmatprep.subr.mxu0 0.0
    %129 = vmatpush1.msra.mxu0 0.0
    %130 = vmatprep.subr.mxu0 0.0
    %131 = vmatpush1.msra.mxu0 0.0
    %132 = vmatprep.subr.mxu0 0.0
    %133 = vmatpush1.msra.mxu0 0.0
    %134 = vmatprep.subr.mxu0 0.0
    %135 = vmatpush1.msra.mxu0 0.0
    %136 = vmatprep.subr.mxu0 0.0
    %137 = vmatpush1.msra.mxu0 0.0
    %138 = vmatprep.subr.mxu0 0.0
    %139 = vmatpush1.msra.mxu0 0.0
    %140 = vmatprep.subr.mxu0 0.0
    %141 = vmatpush1.msra.mxu0 0.0
    %142 = vmatprep.subr.mxu0 0.0
    %143 = vmatpush1.msra.mxu0 0.0
    %144 = vmatprep.subr.mxu0 0.0
    %145 = vmatpush1.msra.mxu0 0.0
    %146 = vmatprep.subr.mxu0 0.0
    %147 = vmatpush1.msra.mxu0 0.0
    %148 = vmatprep.subr.mxu0 0.0
    %149 = vmatpush1.msra.mxu0 0.0
    %150 = vmatprep.subr.mxu0 0.0
    %151 = vmatpush1.msra.mxu0 0.0
    %152 = vmatprep.subr.mxu0 0.0
    %153 = vmatpush1.msra.mxu0 0.0
    %154 = vmatprep.subr.mxu0 0.0
    %155 = vmatpush1.msra.mxu0 0.0
    %156 = vmatprep.subr.mxu0 0.0
    %157 = vmatpush1.msra.mxu0 0.0
    %158 = vmatprep.mubr.f32.mxu0 0.0
    %159 = vmatmul.mubr.f32.gmra.mrb[0].mxu0 %v85
    %v160 = vpop.f32.mrb[0].mxu0
    %v161 = vadd.f32 %v81, %v160
    %v162 = vpop.f32.mrb[0].mxu0
    %163 = vmatprep.mubr.f32.mxu0 0.0
    %164 = vmatmul.mubr.f32.gmra.mrb[0].mxu0 %v88
    %v165 = vpop.f32.mrb[0].mxu0
    %v166 = vadd.f32 %v81, %v165
    %v167 = vpop.f32.mrb[0].mxu0
    %168 = vdwg.mxu0
    %v169 = vmax.f32 %v161, 0.0
    %v170 = vmax.f32 %v166, 0.0
    %vm171 = vcmask 261120
    %172 = vst.msk [vmem:[#allocation9] sm:$0xff] %vm171, %v169
    %173 = vst.msk [vmem:[#allocation9 + $0x8] sm:$0xff] %vm171, %v170
    %v174 = vld [vmem:[#allocation8] sm:$0xff]
    %v175 = vld [vmem:[#allocation8 + $0x8] sm:$0xff]
    %v176 = vld [vmem:[#allocation7] sm:$0xff]
    %v177 = vld [vmem:[#allocation7 + $0x8] sm:$0xff]
    %v178 = vld [vmem:[#allocation7 + $0x10] sm:$0xff]
    %v179 = vld [vmem:[#allocation7 + $0x18] sm:$0xff]
    %v181 = vsel %vm171, %v169, 0
    %v184 = vsel %vm171, %v170, 0
    %186 = vmatprep.subr.mxu0 0.0
    %187 = vmatpush1.msra.mxu0 %v176
    %188 = vmatprep.subr.mxu0 0.0
    %189 = vmatpush1.msra.mxu0 %v177
    %190 = vmatprep.subr.mxu0 0.0
    %191 = vmatpush1.msra.mxu0 %v178
    %192 = vmatprep.subr.mxu0 0.0
    %193 = vmatpush1.msra.mxu0 %v179
    %194 = vmatprep.subr.mxu0 0.0
    %195 = vmatpush1.msra.mxu0 0.0
    %196 = vmatprep.subr.mxu0 0.0
    %197 = vmatpush1.msra.mxu0 0.0
    %198 = vmatprep.subr.mxu0 0.0
    %199 = vmatpush1.msra.mxu0 0.0
    %200 = vmatprep.subr.mxu0 0.0
    %201 = vmatpush1.msra.mxu0 0.0
    %202 = vmatprep.subr.mxu0 0.0
    %203 = vmatpush1.msra.mxu0 0.0
    %204 = vmatprep.subr.mxu0 0.0
    %205 = vmatpush1.msra.mxu0 0.0
    %206 = vmatprep.subr.mxu0 0.0
    %207 = vmatpush1.msra.mxu0 0.0
    %208 = vmatprep.subr.mxu0 0.0
    %209 = vmatpush1.msra.mxu0 0.0
    %210 = vmatprep.subr.mxu0 0.0
    %211 = vmatpush1.msra.mxu0 0.0
    %212 = vmatprep.subr.mxu0 0.0
    %213 = vmatpush1.msra.mxu0 0.0
    %214 = vmatprep.subr.mxu0 0.0
    %215 = vmatpush1.msra.mxu0 0.0
    %216 = vmatprep.subr.mxu0 0.0
    %217 = vmatpush1.msra.mxu0 0.0
    %218 = vmatprep.subr.mxu0 0.0
    %219 = vmatpush1.msra.mxu0 0.0
    %220 = vmatprep.subr.mxu0 0.0
    %221 = vmatpush1.msra.mxu0 0.0
    %222 = vmatprep.subr.mxu0 0.0
    %223 = vmatpush1.msra.mxu0 0.0
    %224 = vmatprep.subr.mxu0 0.0
    %225 = vmatpush1.msra.mxu0 0.0
    %226 = vmatprep.subr.mxu0 0.0
    %227 = vmatpush1.msra.mxu0 0.0
    %228 = vmatprep.subr.mxu0 0.0
    %229 = vmatpush1.msra.mxu0 0.0
    %230 = vmatprep.subr.mxu0 0.0
    %231 = vmatpush1.msra.mxu0 0.0
    %232 = vmatprep.subr.mxu0 0.0
    %233 = vmatpush1.msra.mxu0 0.0
    %234 = vmatprep.subr.mxu0 0.0
    %235 = vmatpush1.msra.mxu0 0.0
    %236 = vmatprep.subr.mxu0 0.0
    %237 = vmatpush1.msra.mxu0 0.0
    %238 = vmatprep.subr.mxu0 0.0
    %239 = vmatpush1.msra.mxu0 0.0
    %240 = vmatprep.subr.mxu0 0.0
    %241 = vmatpush1.msra.mxu0 0.0
    %242 = vmatprep.subr.mxu0 0.0
    %243 = vmatpush1.msra.mxu0 0.0
    %244 = vmatprep.subr.mxu0 0.0
    %245 = vmatpush1.msra.mxu0 0.0
    %246 = vmatprep.subr.mxu0 0.0
    %247 = vmatpush1.msra.mxu0 0.0
    %248 = vmatprep.subr.mxu0 0.0
    %249 = vmatpush1.msra.mxu0 0.0
    %250 = vmatprep.mubr.f32.mxu0 0.0
    %251 = vmatmul.mubr.f32.gmra.mrb[0].mxu0 %v181
    %v252 = vpop.f32.mrb[0].mxu0
    %v253 = vadd.f32 0.0, %v252
    %v254 = vpop.f32.mrb[0].mxu0
    %255 = vmatprep.mubr.f32.mxu0 0.0
    %256 = vmatmul.mubr.f32.gmra.mrb[0].mxu0 %v184
    %v257 = vpop.f32.mrb[0].mxu0
    %v258 = vadd.f32 0.0, %v257
    %v259 = vpop.f32.mrb[0].mxu0
    %260 = vdwg.mxu0
    %v261 = vadd.f32 %v174, %v253
    %v262 = vadd.f32 %v175, %v258
    %263 = vst [vmem:[#allocation8] sm:$0xff] %v261
    %264 = vst [vmem:[#allocation8 + $0x8] sm:$0xff] %v262
    // Predicated region
    $region38: #{tpu_custom_call.1} parent=1 // pred_check
      %p265 = pneg %p65
    $region39: #{tpu_custom_call.1} parent=1 // pred_check_branch
      %267 = sbr.rel (%p265) target = $region41
    $region40: #{tpu_custom_call.1} parent=1 // pred_region
      %v268 = vld [vmem:[#allocation8] sm:$0xff]
      %v269 = vld [vmem:[#allocation8 + $0x8] sm:$0xff]
      %v270 = vld [vmem:[%s4] sm:$0x1]
      %v272 = vlaneseq
      %v273 = vshrl.u32 %v272, 7
      %v274 = vsub.s32 0, %v273
      %v275 = vrot.slane %v270, %v274
      %v277 = vadd.f32 %v268, %v275
      %v278 = vadd.f32 %v269, %v275
      %279 = vst [vmem:[#allocation8] sm:$0xff] %v277
      %280 = vst [vmem:[#allocation8 + $0x8] sm:$0xff] %v278
    $region41: #{tpu_custom_call.1} parent=1 // pred_fallthru
      _
    // Predicated region
    $region42: #{tpu_custom_call.1} parent=1 // pred_check
      _
    $region43: #{tpu_custom_call.1} parent=1 // pred_check_branch
      %282 = sbr.rel (0) target = $region45
    $region44: #{tpu_custom_call.1} parent=1 // pred_region
      %s284 = ssub.s32 256, 256
      %285 = vsyncadd [#allocation4], %s284
      %s286 = sshll.u32 [#allocation8], 4
      %s287 = int_to_ptr.vmem [resolvable:$true] %s286
      %292 = dma.vmem_to_hbm [thread:$0]  %s287, 256, %s5, [#allocation4], 128, 128, 8
    $region45: #{tpu_custom_call.1} parent=1 // pred_fallthru
      _
    // Predicated region
    $region46: #{tpu_custom_call.1} parent=1 // pred_check
      _
    $region47: #{tpu_custom_call.1} parent=1 // pred_check_branch
      %294 = sbr.rel (0) target = $region49
    $region48: #{tpu_custom_call.1} parent=1 // pred_region
      %s296 = ssub.s32 256, 256
      %297 = vsyncadd [#allocation10], %s296
      %s298 = sshll.u32 [#allocation9], 4
      %s299 = int_to_ptr.vmem [resolvable:$true] %s298
      %304 = dma.vmem_to_hbm [thread:$0]  %s299, 256, %s6, [#allocation10], 128, 128, 8
    $region49: #{tpu_custom_call.1} parent=1 // pred_fallthru
      _
    // Predicated region
    $region50: #{tpu_custom_call.1} parent=1 // pred_check
      _
    $region51: #{tpu_custom_call.1} parent=1 // pred_check_branch
      %306 = sbr.rel (0) target = $region53
    $region52: #{tpu_custom_call.1} parent=1 // pred_region
      %307 = dma.done [#allocation4], 256
    $region53: #{tpu_custom_call.1} parent=1 // pred_fallthru
      _
    // Predicated region
    $region54: #{tpu_custom_call.1} parent=1 // pred_check
      _
    $region55: #{tpu_custom_call.1} parent=1 // pred_check_branch
      %309 = sbr.rel (0) target = $region57
    $region56: #{tpu_custom_call.1} parent=1 // pred_region
      %310 = dma.done [#allocation10], 256
    $region57: #{tpu_custom_call.1} parent=1 // pred_fallthru
      _
    %311 = vsyncpa [#allocation3], 1
    %312 = vsyncpa [#allocation6], 1
    %313 = vsyncpa [#allocation4], 1
    %314 = vsyncpa [#allocation10], 1

</llo_original>
